<compile_context>
chip_gen: v5e
topology: v5e:2x2
jax: 0.10.0
libtpu: 0.0.40
codegen_flags: <defaults>
</compile_context>

<pallas_src>
import functools

import numpy as np
import jax
import jax.numpy as jnp
from jax.experimental import pallas as pl
from jax.experimental.pallas import tpu as pltpu


# ----------------------------------------------------------------------------
# sincos positional embedding (identical math to the PyTorch reference;
# host-side numpy, exactly like the nn.Parameter init in the module __init__)
# ----------------------------------------------------------------------------
def get_1d_sincos_pos_embed_from_grid(embed_dim, pos):
    assert embed_dim % 2 == 0
    omega = np.arange(embed_dim // 2, dtype=np.float64)
    omega /= embed_dim / 2.0
    omega = 1.0 / 10000 ** omega
    pos = pos.reshape(-1)
    out = np.einsum('m,d->md', pos, omega)
    emb_sin = np.sin(out)
    emb_cos = np.cos(out)
    return np.concatenate([emb_sin, emb_cos], axis=1)


def get_2d_sincos_pos_embed_from_grid(embed_dim, grid):
    assert embed_dim % 2 == 0
    emb_h = get_1d_sincos_pos_embed_from_grid(embed_dim // 2, grid[0])
    emb_w = get_1d_sincos_pos_embed_from_grid(embed_dim // 2, grid[1])
    return np.concatenate([emb_h, emb_w], axis=1)


def get_2d_sincos_pos_embed(embed_dim, grid_size):
    grid_h = np.arange(grid_size, dtype=np.float32)
    grid_w = np.arange(grid_size, dtype=np.float32)
    grid = np.meshgrid(grid_w, grid_h)
    grid = np.stack(grid, axis=0)
    grid = grid.reshape([2, 1, grid_size, grid_size])
    return get_2d_sincos_pos_embed_from_grid(embed_dim, grid)


# ----------------------------------------------------------------------------
# Pallas kernel: (tm, K)bf16 @ (K, D)bf16 -> f32 + bias -> LayerNorm -> + pos
# ----------------------------------------------------------------------------
def image_embedder_kernel(x_ref, w_ref, b_ref, g_ref, beta_ref, pos_ref, o_ref,
                          *, tm, n_l):
    # x_ref:    (tm, K)  bf16   patch rows of one image tile (streamed)
    # w_ref:    (K, D)   bf16   flattened conv weight (VMEM-resident)
    # b_ref:    (1, D)   f32    conv bias
    # g_ref:    (1, D)   f32    LayerNorm weight
    # beta_ref: (1, D)   f32    LayerNorm bias
    # pos_ref:  (L, D)   f32    full positional-embedding table (resident)
    # o_ref:    (tm, D)         output rows
    y = jnp.dot(x_ref[...], w_ref[...], preferred_element_type=jnp.float32)
    y = y + b_ref[...]

    # LayerNorm over last dim (torch default: biased variance, eps=1e-5), f32.
    mean = jnp.mean(y, axis=-1, keepdims=True)
    centered = y - mean
    var = jnp.mean(centered * centered, axis=-1, keepdims=True)
    y = centered * jax.lax.rsqrt(var + 1e-5)
    y = y * g_ref[...] + beta_ref[...]

    # Positional embedding stays VMEM-resident; slice the rows for this tile.
    if n_l == 1:
        pos = pos_ref[...]
    else:
        start = pl.multiple_of(pl.program_id(1) * tm, 8)
        pos = pos_ref[pl.ds(start, tm), :]

    o_ref[...] = (y + pos).astype(o_ref.dtype)


def _pick_row_tile(L, block_m):
    """Largest divisor of L that is <= block_m, preferring %16==0, then %8==0."""
    limit = min(block_m, L)
    for align in (16, 8):
        for cand in range(limit, align - 1, -1):
            if cand % align == 0 and L % cand == 0:
                return cand
    # Awkward L (e.g. 14x14=196): one full-length tile (block dim == array dim).
    return L


def image_embedder_forward(image, conv_w, conv_b, ln_w, ln_b, pos_embed,
                           patch_size, *, block_m=1024, out_dtype=jnp.float32):
    """image: (B, C, H, W) NCHW, conv_w: (D, C, P, P), conv_b: (D,).

    Returns (B, L, D) with L = (H/P)*(W/P).  Call under jax.jit so the im2col
    producer can be input-fused into the Pallas DMA.
    """
    B, C, H, W = image.shape
    D = conv_w.shape[0]
    P = patch_size
    Hp, Wp = H // P, W // P
    L = Hp * Wp
    K = C * P * P

    # --- im2col of the stride-P NCHW conv; not materialized separately when
    #     XLA input-fuses it into the Pallas patch-operand DMA. -------------
    patches = image.reshape(B, C, Hp, P, Wp, P)
    patches = patches.transpose(0, 2, 4, 1, 3, 5).reshape(B, L, K)
    patches = patches.astype(jnp.bfloat16)
    # In a real model the weight layout/cast below is done once at load time.
    w = conv_w.reshape(D, K).T.astype(jnp.bfloat16)        # (K, D)
    b = conv_b.reshape(1, D).astype(jnp.float32)
    g = ln_w.reshape(1, D).astype(jnp.float32)
    beta = ln_b.reshape(1, D).astype(jnp.float32)
    pos = pos_embed.reshape(L, D).astype(jnp.float32)

    tm = _pick_row_tile(L, block_m)
    n_l = L // tm

    # --- VMEM budget: streamed blocks double-buffered, residents counted x2
    #     (Pallas allocates two buffers per spec today). ---------------------
    out_bytes = jnp.dtype(out_dtype).itemsize
    est = (2 * tm * K * 2          # patch rows (bf16, double-buffered)
           + 2 * K * D * 2         # conv weight (bf16, resident)
           + 2 * L * D * 4         # pos table   (f32, resident)
           + 2 * tm * D * out_bytes
           + 8 * D * 4)            # bias / LN params
    vmem_limit = int(min(max(2 * est, 32 * 1024 * 1024), 48 * 1024 * 1024))

    cost = pl.CostEstimate(
        flops=2 * B * L * K * D + 8 * B * L * D,
        transcendentals=B * L,                       # one rsqrt per row
        bytes_accessed=(B * L * K * 2 + K * D * 2 + L * D * 4 + 3 * D * 4
                        + B * L * D * out_bytes),
    )

    kernel = functools.partial(image_embedder_kernel, tm=tm, n_l=n_l)

    out = pl.pallas_call(
        kernel,
        out_shape=jax.ShapeDtypeStruct((B, L, D), out_dtype),
        grid=(B, n_l),
        in_specs=[
            pl.BlockSpec((None, tm, K), lambda bi, j: (bi, j, 0)),  # patches
            pl.BlockSpec((K, D), lambda bi, j: (0, 0)),             # conv W
            pl.BlockSpec((1, D), lambda bi, j: (0, 0)),             # conv b
            pl.BlockSpec((1, D), lambda bi, j: (0, 0)),             # LN gamma
            pl.BlockSpec((1, D), lambda bi, j: (0, 0)),             # LN beta
            pl.BlockSpec((L, D), lambda bi, j: (0, 0)),             # pos (resident)
        ],
        out_specs=pl.BlockSpec((None, tm, D), lambda bi, j: (bi, j, 0)),
        compiler_params=pltpu.CompilerParams(
            dimension_semantics=("parallel", "parallel"),  # rows split over TCs
            vmem_limit_bytes=vmem_limit,
            # Let XLA fuse the im2col / weight-layout producers into the input
            # DMA instead of materializing them in HBM.
            allow_input_fusion=[True, True, False, False, False, False],
        ),
        cost_estimate=cost,
    )(patches, w, b, g, beta, pos)
    return out


# ----------------------------------------------------------------------------
# pure-JAX f32 reference for correctness check
# ----------------------------------------------------------------------------
def reference_forward(image, conv_w, conv_b, ln_w, ln_b, pos_embed, patch_size):
    B, C, H, W = image.shape
    D = conv_w.shape[0]
    P = patch_size
    Hp, Wp = H // P, W // P
    L = Hp * Wp
    K = C * P * P
    patches = image.reshape(B, C, Hp, P, Wp, P)
    patches = patches.transpose(0, 2, 4, 1, 3, 5).reshape(B, L, K)
    y = patches @ conv_w.reshape(D, K).T + conv_b
    mean = jnp.mean(y, axis=-1, keepdims=True)
    var = jnp.mean((y - mean) ** 2, axis=-1, keepdims=True)
    y = (y - mean) * jax.lax.rsqrt(var + 1e-5) * ln_w + ln_b
    return y + pos_embed


if __name__ == "__main__":
    # Small shapes consistent with the module: ImageEmbedder(dim=32,
    # image_size=(16,16), patch_size=(4,4), in_channels=3), batch=2.
    B, C, H, W = 2, 3, 16, 16
    P = 4
    dim = 32
    Hp = H // P
    L = Hp * (W // P)

    key = jax.random.PRNGKey(0)
    k_img, k_w, k_b = jax.random.split(key, 3)

    image = jax.random.normal(k_img, (B, C, H, W), dtype=jnp.float32)

    # Deterministic parameter init (synthetic; shapes from the module __init__).
    conv_w = jax.random.normal(k_w, (dim, C, P, P), dtype=jnp.float32) * 0.05
    conv_b = jax.random.normal(k_b, (dim,), dtype=jnp.float32) * 0.05
    ln_w = jnp.ones((dim,), dtype=jnp.float32)     # nn.LayerNorm default init
    ln_b = jnp.zeros((dim,), dtype=jnp.float32)

    pos_embed_np = get_2d_sincos_pos_embed(dim, Hp).astype(np.float32)  # (L, D)
    pos_embed = jnp.asarray(pos_embed_np)[None]                          # (1, L, D)

    ref = reference_forward(image, conv_w, conv_b, ln_w, ln_b, pos_embed, P)

    # Default config (f32 output): one L tile per image at these toy sizes,
    # 1024-row tiles at real image sizes.
    fwd = jax.jit(functools.partial(image_embedder_forward, patch_size=P))
    out = jax.block_until_ready(fwd(image, conv_w, conv_b, ln_w, ln_b, pos_embed))
    assert out.shape == (B, L, dim)
    # bf16 MXU inputs with f32 accumulation -> loosened tolerance vs f32 ref.
    np.testing.assert_allclose(np.asarray(out), np.asarray(ref),
                               rtol=5e-2, atol=5e-2)

    # Small-tile bf16-output config exercises the 2-D grid (B, L//tm), the
    # in-kernel pl.ds slicing of the resident pos table, and the reduced
    # writeback path recommended for v5e.
    fwd_small = jax.jit(functools.partial(image_embedder_forward, patch_size=P,
                                          block_m=8, out_dtype=jnp.bfloat16))
    out_small = jax.block_until_ready(
        fwd_small(image, conv_w, conv_b, ln_w, ln_b, pos_embed))
    np.testing.assert_allclose(np.asarray(out_small.astype(jnp.float32)),
                               np.asarray(ref), rtol=5e-2, atol=5e-2)

    print("KERNEL_OK")
</pallas_src>

<mosaic_0001>
module attributes {stable_mosaic.version = 11 : i64} {
  func.func @image_embedder_kernel(%arg0: i32, %arg1: i32, %arg2: memref<1x16x48xbf16, #tpu.memory_space<vmem>>, %arg3: memref<48x32xbf16, #tpu.memory_space<vmem>>, %arg4: memref<1x32xf32, #tpu.memory_space<vmem>>, %arg5: memref<1x32xf32, #tpu.memory_space<vmem>>, %arg6: memref<1x32xf32, #tpu.memory_space<vmem>>, %arg7: memref<16x32xf32, #tpu.memory_space<vmem>>, %arg8: memref<1x16x32xf32, #tpu.memory_space<vmem>>) attributes {dimension_semantics = [#tpu.dimension_semantics<parallel>, #tpu.dimension_semantics<parallel>], iteration_bounds = array<i64: 2, 1>, scalar_prefetch = 0 : i64, scratch_operands = 0 : i64, tpu.core_type = #tpu.core_type<tc>, window_params = [{transform_indices = @transform_0, window_bounds = array<i64: 1, 16, 48>}, {pipeline_mode = #tpu.pipeline_mode<synchronous>, transform_indices = @transform_1, window_bounds = array<i64: 48, 32>}, {pipeline_mode = #tpu.pipeline_mode<synchronous>, transform_indices = @transform_2, window_bounds = array<i64: 1, 32>}, {pipeline_mode = #tpu.pipeline_mode<synchronous>, transform_indices = @transform_3, window_bounds = array<i64: 1, 32>}, {pipeline_mode = #tpu.pipeline_mode<synchronous>, transform_indices = @transform_4, window_bounds = array<i64: 1, 32>}, {pipeline_mode = #tpu.pipeline_mode<synchronous>, transform_indices = @transform_5, window_bounds = array<i64: 16, 32>}, {transform_indices = @transform_6, window_bounds = array<i64: 1, 16, 32>}]} {
    %c0 = arith.constant 0 : index
    %c0_0 = arith.constant 0 : index
    %c0_1 = arith.constant 0 : index
    %0 = vector.load %arg2[%c0, %c0_0, %c0_1] : memref<1x16x48xbf16, #tpu.memory_space<vmem>>, vector<1x16x48xbf16>
    %1 = vector.shape_cast %0 : vector<1x16x48xbf16> to vector<16x48xbf16>
    %c0_2 = arith.constant 0 : index
    %c0_3 = arith.constant 0 : index
    %2 = vector.load %arg3[%c0_2, %c0_3] : memref<48x32xbf16, #tpu.memory_space<vmem>>, vector<48x32xbf16>
    %cst = arith.constant dense<0.000000e+00> : vector<16x32xf32>
    %3 = tpu.matmul %1, %2, %cst {dimension_numbers = #tpu.dot_dimension_numbers<[1], [0], [0], [1], [0, 0, 1, 1], [], []>} : vector<16x48xbf16>, vector<48x32xbf16>, vector<16x32xf32> -> vector<16x32xf32>
    %c0_4 = arith.constant 0 : index
    %c0_5 = arith.constant 0 : index
    %4 = vector.load %arg4[%c0_4, %c0_5] : memref<1x32xf32, #tpu.memory_space<vmem>>, vector<1x32xf32>
    %5 = vector.broadcast %4 : vector<1x32xf32> to vector<16x32xf32>
    %6 = arith.addf %3, %5 : vector<16x32xf32>
    %cst_6 = arith.constant dense<0.000000e+00> : vector<16xf32>
    %7 = vector.multi_reduction <add>, %6, %cst_6 [1] : vector<16x32xf32> to vector<16xf32>
    %8 = vector.shape_cast %7 : vector<16xf32> to vector<16x1xf32>
    %cst_7 = arith.constant 3.200000e+01 : f32
    %9 = vector.broadcast %cst_7 : f32 to vector<16x1xf32>
    %10 = arith.divf %8, %9 : vector<16x1xf32>
    %11 = vector.broadcast %10 : vector<16x1xf32> to vector<16x32xf32>
    %12 = arith.subf %6, %11 : vector<16x32xf32>
    %13 = arith.mulf %12, %12 : vector<16x32xf32>
    %cst_8 = arith.constant dense<0.000000e+00> : vector<16xf32>
    %14 = vector.multi_reduction <add>, %13, %cst_8 [1] : vector<16x32xf32> to vector<16xf32>
    %15 = vector.shape_cast %14 : vector<16xf32> to vector<16x1xf32>
    %cst_9 = arith.constant 3.200000e+01 : f32
    %16 = vector.broadcast %cst_9 : f32 to vector<16x1xf32>
    %17 = arith.divf %15, %16 : vector<16x1xf32>
    %cst_10 = arith.constant 9.99999974E-6 : f32
    %18 = vector.broadcast %cst_10 : f32 to vector<16x1xf32>
    %19 = arith.addf %17, %18 : vector<16x1xf32>
    %20 = math.rsqrt %19 : vector<16x1xf32>
    %21 = vector.broadcast %20 : vector<16x1xf32> to vector<16x32xf32>
    %22 = arith.mulf %12, %21 : vector<16x32xf32>
    %c0_11 = arith.constant 0 : index
    %c0_12 = arith.constant 0 : index
    %23 = vector.load %arg5[%c0_11, %c0_12] : memref<1x32xf32, #tpu.memory_space<vmem>>, vector<1x32xf32>
    %24 = vector.broadcast %23 : vector<1x32xf32> to vector<16x32xf32>
    %25 = arith.mulf %22, %24 : vector<16x32xf32>
    %c0_13 = arith.constant 0 : index
    %c0_14 = arith.constant 0 : index
    %26 = vector.load %arg6[%c0_13, %c0_14] : memref<1x32xf32, #tpu.memory_space<vmem>>, vector<1x32xf32>
    %27 = vector.broadcast %26 : vector<1x32xf32> to vector<16x32xf32>
    %28 = arith.addf %25, %27 : vector<16x32xf32>
    %c0_15 = arith.constant 0 : index
    %c0_16 = arith.constant 0 : index
    %29 = vector.load %arg7[%c0_15, %c0_16] : memref<16x32xf32, #tpu.memory_space<vmem>>, vector<16x32xf32>
    %30 = arith.addf %28, %29 : vector<16x32xf32>
    %c0_17 = arith.constant 0 : index
    %c0_18 = arith.constant 0 : index
    %c0_19 = arith.constant 0 : index
    %31 = vector.load %arg8[%c0_17, %c0_18, %c0_19] : memref<1x16x32xf32, #tpu.memory_space<vmem>>, vector<1x16x32xf32>
    %32 = vector.shape_cast %31 : vector<1x16x32xf32> to vector<16x32xf32>
    %33 = vector.shape_cast %30 : vector<16x32xf32> to vector<1x16x32xf32>
    tpu.vector_store %arg8[%c0_17, %c0_18, %c0_19], %33 {strides = array<i32>} : memref<1x16x32xf32, #tpu.memory_space<vmem>>, vector<1x16x32xf32>,
    return
  }
  func.func @transform_0(%arg0: i32, %arg1: i32) -> (i32, i32, i32) {
    %c0_i32 = arith.constant 0 : i32
    %c0_i32_0 = arith.constant 0 : i32
    return %arg0, %arg1, %c0_i32 : i32, i32, i32
  }
  func.func @transform_1(%arg0: i32, %arg1: i32) -> (i32, i32) {
    %c0_i32 = arith.constant 0 : i32
    %c0_i32_0 = arith.constant 0 : i32
    %c0_i32_1 = arith.constant 0 : i32
    return %c0_i32, %c0_i32_0 : i32, i32
  }
  func.func @transform_2(%arg0: i32, %arg1: i32) -> (i32, i32) {
    %c0_i32 = arith.constant 0 : i32
    %c0_i32_0 = arith.constant 0 : i32
    %c0_i32_1 = arith.constant 0 : i32
    return %c0_i32, %c0_i32_0 : i32, i32
  }
  func.func @transform_3(%arg0: i32, %arg1: i32) -> (i32, i32) {
    %c0_i32 = arith.constant 0 : i32
    %c0_i32_0 = arith.constant 0 : i32
    %c0_i32_1 = arith.constant 0 : i32
    return %c0_i32, %c0_i32_0 : i32, i32
  }
  func.func @transform_4(%arg0: i32, %arg1: i32) -> (i32, i32) {
    %c0_i32 = arith.constant 0 : i32
    %c0_i32_0 = arith.constant 0 : i32
    %c0_i32_1 = arith.constant 0 : i32
    return %c0_i32, %c0_i32_0 : i32, i32
  }
  func.func @transform_5(%arg0: i32, %arg1: i32) -> (i32, i32) {
    %c0_i32 = arith.constant 0 : i32
    %c0_i32_0 = arith.constant 0 : i32
    %c0_i32_1 = arith.constant 0 : i32
    return %c0_i32, %c0_i32_0 : i32, i32
  }
  func.func @transform_6(%arg0: i32, %arg1: i32) -> (i32, i32, i32) {
    %c0_i32 = arith.constant 0 : i32
    %c0_i32_0 = arith.constant 0 : i32
    return %arg0, %arg1, %c0_i32 : i32, i32, i32
  }
}

</mosaic_0001>

<llo_original>
// kernel: image_embedder_forward.1
$region0: #{image_embedder_forward.1}
  #allocation0 [shape = 'u32[]', space=smem, size = 0x4, offset = 0x4, fixed_abs, tag = 'smem constant byte address 0x4 - core index']
  #allocation1 [shape = 'u32[72,128]{1,0:T(1,128)}', space=vmem, size = 0x9000, scoped, tag = 'internal scratch']
  %s0 = inlined_call_operand.vmem [shape: bf16[2,16,48], index: 0, kind: input, shape index: {}]
  %s1 = inlined_call_operand.vmem [shape: bf16[48,32], index: 1, kind: input, shape index: {}]
  %s2 = inlined_call_operand.vmem [shape: f32[1,32], index: 2, kind: input, shape index: {}]
  %s3 = inlined_call_operand.vmem [shape: f32[1,32], index: 3, kind: input, shape index: {}]
  %s4 = inlined_call_operand.vmem [shape: f32[1,32], index: 4, kind: input, shape index: {}]
  %s5 = inlined_call_operand.vmem [shape: f32[16,32], index: 5, kind: input, shape index: {}]
  %s6 = inlined_call_operand.hbm [shape: f32[2,16,32], index: 6, kind: output, shape index: {}]
  %s7 = sld [smem:[#allocation0]]
  $region57: #{image_embedder_forward.1} parent=0
    _
  %s9 = ssub.s32 1, %s7
  %s10 = scalar_select 0, %s9, %s7
  $region1: #{image_embedder_forward.1} parent=0
    #allocation2 [shape = 'u8[16384]{0}', space=vmem, size = 0x4000, scoped, tag = 'output window, operand 0']
    #allocation3 [shape = 's32[2]{0}', space=sflag, size = 0x8, scoped, tag = 'scoped memory for image_embedder_forward.1']
    %11 = vsyncpa [#allocation3], 0
    %s12 = scalar_lea.sflag [#allocation3], 1
    %13 = vsyncpa %s12, 0
    loop: start=0, step=1, limit=4
    $region2: #{image_embedder_forward.1} parent=1 // loop_pre_header
      _
    $region3: #{image_embedder_forward.1} parent=1 // loop_header
      %s15 = sphi 0, %s19
      %p16 = scmp.ge.s32.totalorder %s15, 4
      %s22 = sphi 0, %s34
      %s23 = sphi 0, %s30
      %s24 = sphi 0, %s22
      %s25 = sphi 0, %s23
      %s26 = sphi 0, %s24
      %s27 = sphi 0, %s25
      %s39 = sphi 0, %s41
      %s42 = sphi 0, %s39
      %s43 = sphi 0, %s42
      %s59 = sphi 0, %s43
      %s63 = sphi 0, %s63
      %s65 = sphi 0, %s63
      %s66 = sphi 0, %s65
      %s80 = sphi 0, %s66
      %s84 = sphi 0, %s84
      %s86 = sphi 0, %s84
      %s87 = sphi 0, %s86
      %s101 = sphi 0, %s87
      %s105 = sphi 0, %s105
      %s107 = sphi 0, %s105
      %s108 = sphi 0, %s107
      %s122 = sphi 0, %s108
      %s126 = sphi 0, %s126
      %s128 = sphi 0, %s126
      %s129 = sphi 0, %s128
      %s143 = sphi 0, %s129
      %s147 = sphi 0, %s147
      %s149 = sphi 0, %s147
      %s150 = sphi 0, %s149
      %s164 = sphi 0, %s150
      %s172 = sphi 0, %s174
      %s175 = sphi 0, %s172
      %s176 = sphi 0, %s175
      %s192 = sphi 0, %s176
    $region4: #{image_embedder_forward.1} parent=1 // loop_header_branch
      %18 = sbr.rel (%p16) target = $region8
    $region5: #{image_embedder_forward.1} parent=1 // loop_body
      %s20 = ssub.s32 %s15, 1
      %s21 = ssub.s32 %s15, 2
      %s28 = sadd.s32 1, %s23
      %p29 = scmp.ge.s32.totalorder %s28, 1
      %s30 = scalar_select %p29, 0, %s28
      %s31 = sadd.s32 1, %s22
      %s32 = scalar_select %p29, %s31, %s22
      %p33 = scmp.ge.s32.totalorder %s32, 2
      %s34 = scalar_select %p33, 0, %s32
      %s35 = ssub.s32 %s22, %s34
      %s36 = ssub.s32 %s23, %s30
      %s37 = sor.u32 %s35, %s36
      %p38 = scmp.eq.s32.totalorder %s37, 0
      %s40 = sadd.s32 %s39, 1
      %s41 = scalar_select %p38, %s39, %s40
      %p44 = pneg %p38
      %p45 = scmp.eq.s32.totalorder %s15, 1
      %p46 = por %p44, %p45
      %p47 = scmp.ne.s32.totalorder %s39, %s42
      %p48 = scmp.eq.s32.totalorder %s15, 0
      %p49 = por %p47, %p48
      %p50 = scmp.ne.s32.totalorder %s39, %s42
      %p51 = scmp.eq.s32.totalorder %s20, 1
      %p52 = por %p50, %p51
      %p53 = scmp.ne.s32.totalorder %s42, %s43
      %p54 = scmp.eq.s32.totalorder %s20, 0
      %p55 = por %p53, %p54
      %p56 = scmp.ne.s32.totalorder %s42, %s43
      %p57 = scmp.eq.s32.totalorder %s21, 1
      %p58 = por %p56, %p57
      %p60 = scmp.ne.s32.totalorder %s43, %s59
      %p61 = scmp.eq.s32.totalorder %s21, 0
      %p62 = por %p60, %p61
      %s64 = sadd.s32 %s63, 1
      %p67 = scmp.eq.s32.totalorder %s15, 1
      %p68 = scmp.ne.s32.totalorder %s63, %s65
      %p69 = scmp.eq.s32.totalorder %s15, 0
      %p70 = por %p68, %p69
      %p71 = scmp.ne.s32.totalorder %s63, %s65
      %p72 = scmp.eq.s32.totalorder %s20, 1
      %p73 = por %p71, %p72
      %p74 = scmp.ne.s32.totalorder %s65, %s66
      %p75 = scmp.eq.s32.totalorder %s20, 0
      %p76 = por %p74, %p75
      %p77 = scmp.ne.s32.totalorder %s65, %s66
      %p78 = scmp.eq.s32.totalorder %s21, 1
      %p79 = por %p77, %p78
      %p81 = scmp.ne.s32.totalorder %s66, %s80
      %p82 = scmp.eq.s32.totalorder %s21, 0
      %p83 = por %p81, %p82
      %s85 = sadd.s32 %s84, 1
      %p88 = scmp.eq.s32.totalorder %s15, 1
      %p89 = scmp.ne.s32.totalorder %s84, %s86
      %p90 = scmp.eq.s32.totalorder %s15, 0
      %p91 = por %p89, %p90
      %p92 = scmp.ne.s32.totalorder %s84, %s86
      %p93 = scmp.eq.s32.totalorder %s20, 1
      %p94 = por %p92, %p93
      %p95 = scmp.ne.s32.totalorder %s86, %s87
      %p96 = scmp.eq.s32.totalorder %s20, 0
      %p97 = por %p95, %p96
      %p98 = scmp.ne.s32.totalorder %s86, %s87
      %p99 = scmp.eq.s32.totalorder %s21, 1
      %p100 = por %p98, %p99
      %p102 = scmp.ne.s32.totalorder %s87, %s101
      %p103 = scmp.eq.s32.totalorder %s21, 0
      %p104 = por %p102, %p103
      %s106 = sadd.s32 %s105, 1
      %p109 = scmp.eq.s32.totalorder %s15, 1
      %p110 = scmp.ne.s32.totalorder %s105, %s107
      %p111 = scmp.eq.s32.totalorder %s15, 0
      %p112 = por %p110, %p111
      %p113 = scmp.ne.s32.totalorder %s105, %s107
      %p114 = scmp.eq.s32.totalorder %s20, 1
      %p115 = por %p113, %p114
      %p116 = scmp.ne.s32.totalorder %s107, %s108
      %p117 = scmp.eq.s32.totalorder %s20, 0
      %p118 = por %p116, %p117
      %p119 = scmp.ne.s32.totalorder %s107, %s108
      %p120 = scmp.eq.s32.totalorder %s21, 1
      %p121 = por %p119, %p120
      %p123 = scmp.ne.s32.totalorder %s108, %s122
      %p124 = scmp.eq.s32.totalorder %s21, 0
      %p125 = por %p123, %p124
      %s127 = sadd.s32 %s126, 1
      %p130 = scmp.eq.s32.totalorder %s15, 1
      %p131 = scmp.ne.s32.totalorder %s126, %s128
      %p132 = scmp.eq.s32.totalorder %s15, 0
      %p133 = por %p131, %p132
      %p134 = scmp.ne.s32.totalorder %s126, %s128
      %p135 = scmp.eq.s32.totalorder %s20, 1
      %p136 = por %p134, %p135
      %p137 = scmp.ne.s32.totalorder %s128, %s129
      %p138 = scmp.eq.s32.totalorder %s20, 0
      %p139 = por %p137, %p138
      %p140 = scmp.ne.s32.totalorder %s128, %s129
      %p141 = scmp.eq.s32.totalorder %s21, 1
      %p142 = por %p140, %p141
      %p144 = scmp.ne.s32.totalorder %s129, %s143
      %p145 = scmp.eq.s32.totalorder %s21, 0
      %p146 = por %p144, %p145
      %s148 = sadd.s32 %s147, 1
      %p151 = scmp.eq.s32.totalorder %s15, 1
      %p152 = scmp.ne.s32.totalorder %s147, %s149
      %p153 = scmp.eq.s32.totalorder %s15, 0
      %p154 = por %p152, %p153
      %p155 = scmp.ne.s32.totalorder %s147, %s149
      %p156 = scmp.eq.s32.totalorder %s20, 1
      %p157 = por %p155, %p156
      %p158 = scmp.ne.s32.totalorder %s149, %s150
      %p159 = scmp.eq.s32.totalorder %s20, 0
      %p160 = por %p158, %p159
      %p161 = scmp.ne.s32.totalorder %s149, %s150
      %p162 = scmp.eq.s32.totalorder %s21, 1
      %p163 = por %p161, %p162
      %p165 = scmp.ne.s32.totalorder %s150, %s164
      %p166 = scmp.eq.s32.totalorder %s21, 0
      %p167 = por %p165, %p166
      %s168 = ssub.s32 %s22, %s34
      %s169 = ssub.s32 %s23, %s30
      %s170 = sor.u32 %s168, %s169
      %p171 = scmp.eq.s32.totalorder %s170, 0
      %s173 = sadd.s32 %s172, 1
      %s174 = scalar_select %p171, %s172, %s173
      %p177 = pneg %p171
      %p178 = scmp.eq.s32.totalorder %s15, 1
      %p179 = por %p177, %p178
      %p180 = scmp.ne.s32.totalorder %s172, %s175
      %p181 = scmp.eq.s32.totalorder %s15, 0
      %p182 = por %p180, %p181
      %p183 = scmp.ne.s32.totalorder %s172, %s175
      %p184 = scmp.eq.s32.totalorder %s20, 1
      %p185 = por %p183, %p184
      %p186 = scmp.ne.s32.totalorder %s175, %s176
      %p187 = scmp.eq.s32.totalorder %s20, 0
      %p188 = por %p186, %p187
      %p189 = scmp.ne.s32.totalorder %s175, %s176
      %p190 = scmp.eq.s32.totalorder %s21, 1
      %p191 = por %p189, %p190
      %p193 = scmp.ne.s32.totalorder %s176, %s192
      %p194 = scmp.eq.s32.totalorder %s21, 0
      %p195 = por %p193, %p194
      %p196 = scmp.le.s32.totalorder 1, %s15
      %p197 = scmp.lt.s32.totalorder %s15, 3
      %p198 = pnand %p196, %p197
      %p199 = pneg %p198
      // Predicated region
      $region9: #{image_embedder_forward.1} parent=5 // pred_check
        _
      $region10: #{image_embedder_forward.1} parent=5 // pred_check_branch
        %201 = sbr.rel (%p198) target = $region12
      $region11: #{image_embedder_forward.1} parent=5 // pred_region
        %s202 = ssub.s32 %s15, 1
        // Predicated region
        $region13: #{image_embedder_forward.1} parent=11 // pred_check
          %p203 = pneg %p76
        $region14: #{image_embedder_forward.1} parent=11 // pred_check_branch
          %205 = sbr.rel (%p203) target = $region16
        $region15: #{image_embedder_forward.1} parent=11 // pred_region
          _
        $region16: #{image_embedder_forward.1} parent=11 // pred_fallthru
          _
        // Predicated region
        $region17: #{image_embedder_forward.1} parent=11 // pred_check
          %p206 = pneg %p97
        $region18: #{image_embedder_forward.1} parent=11 // pred_check_branch
          %208 = sbr.rel (%p206) target = $region20
        $region19: #{image_embedder_forward.1} parent=11 // pred_region
          _
        $region20: #{image_embedder_forward.1} parent=11 // pred_fallthru
          _
        // Predicated region
        $region21: #{image_embedder_forward.1} parent=11 // pred_check
          %p209 = pneg %p118
        $region22: #{image_embedder_forward.1} parent=11 // pred_check_branch
          %211 = sbr.rel (%p209) target = $region24
        $region23: #{image_embedder_forward.1} parent=11 // pred_region
          _
        $region24: #{image_embedder_forward.1} parent=11 // pred_fallthru
          _
        // Predicated region
        $region25: #{image_embedder_forward.1} parent=11 // pred_check
          %p212 = pneg %p139
        $region26: #{image_embedder_forward.1} parent=11 // pred_check_branch
          %214 = sbr.rel (%p212) target = $region28
        $region27: #{image_embedder_forward.1} parent=11 // pred_region
          _
        $region28: #{image_embedder_forward.1} parent=11 // pred_fallthru
          _
        // Predicated region
        $region29: #{image_embedder_forward.1} parent=11 // pred_check
          %p215 = pneg %p160
        $region30: #{image_embedder_forward.1} parent=11 // pred_check_branch
          %217 = sbr.rel (%p215) target = $region32
        $region31: #{image_embedder_forward.1} parent=11 // pred_region
          _
        $region32: #{image_embedder_forward.1} parent=11 // pred_fallthru
          _
      $region12: #{image_embedder_forward.1} parent=5 // pred_fallthru
        _
      %p218 = scmp.lt.s32.totalorder %s15, 2
      // Predicated region
      $region33: #{image_embedder_forward.1} parent=5 // pred_check
        %p219 = pneg %p218
      $region34: #{image_embedder_forward.1} parent=5 // pred_check_branch
        %221 = sbr.rel (%p219) target = $region36
      $region35: #{image_embedder_forward.1} parent=5 // pred_region
        // Predicated region
        $region37: #{image_embedder_forward.1} parent=35 // pred_check
          %p222 = pneg %p49
        $region38: #{image_embedder_forward.1} parent=35 // pred_check_branch
          %224 = sbr.rel (%p222) target = $region40
        $region39: #{image_embedder_forward.1} parent=35 // pred_region
          %s225 = smul.u32 2, %s23
          %p226 = scmp.lt.s32.totalorder %s22, 1
          %s227 = scalar_select %p226, %s22, 1
          %p228 = scmp.lt.s32.totalorder %s225, 1
          %s229 = scalar_select %p228, %s225, 1
          %s230 = smul.addr %s227, 2
          %s231 = sadd.s32 %s229, %s230
          %s232 = smul.addr %s231, 4
          %s233 = scalar_lea.vmem %s0, %s232
          %s234 = smul.u32 2, %s23
        $region40: #{image_embedder_forward.1} parent=35 // pred_fallthru
          _
      $region36: #{image_embedder_forward.1} parent=5 // pred_fallthru
        _
      %p235 = scmp.le.s32.totalorder 1, %s15
      %p236 = scmp.lt.s32.totalorder %s15, 3
      %p237 = pnand %p235, %p236
      %p238 = pneg %p237
      // Predicated region
      $region41: #{image_embedder_forward.1} parent=5 // pred_check
        _
      $region42: #{image_embedder_forward.1} parent=5 // pred_check_branch
        %240 = sbr.rel (%p237) target = $region44
      $region43: #{image_embedder_forward.1} parent=5 // pred_region
        %s241 = ssub.s32 %s15, 1
        %s242 = smul.u32 2, %s25
        %p243 = scmp.lt.s32.totalorder %s24, 1
        %s244 = scalar_select %p243, %s24, 1
        %p245 = scmp.lt.s32.totalorder %s242, 1
        %s246 = scalar_select %p245, %s242, 1
        %s247 = smul.addr %s244, 2
        %s248 = sadd.s32 %s246, %s247
        %s249 = smul.addr %s248, 4
        %s250 = scalar_lea.vmem %s0, %s249
        %p251 = pneg %p55
        %p252 = pneg %p52
        %p253 = pneg %p76
        %p254 = pneg %p73
        %p255 = pneg %p97
        %p256 = pneg %p94
        %p257 = pneg %p118
        %p258 = pneg %p115
        %p259 = pneg %p139
        %p260 = pneg %p136
        %p261 = pneg %p160
        %p262 = pneg %p157
        %p263 = pneg %p188
        %p264 = pneg %p185
        %s265 = sand.u32 %s175, 1
        %s266 = scalar_lea.sflag [#allocation3], %s265
        %s267 = sand.u32 %s175, 1
        %s268 = smul.addr %s267, 16
        %s269 = scalar_lea.vmem [#allocation2], %s268
        %s270 = smul.u32 2, %s25
        %p271 = scmp.lt.s32.totalorder %s24, 1
        %s272 = scalar_select %p271, %s24, 1
        %p273 = scmp.lt.s32.totalorder %s270, 1
        %s274 = scalar_select %p273, %s270, 1
        %s275 = smul.addr %s272, 2
        %s276 = sadd.s32 %s274, %s275
        %s277 = smul.addr %s276, 4
        %s278 = scalar_lea.vmem %s0, %s277
        %s279 = smul.u32 2, %s25
        %s280 = smul.u32 2, %s25
        %v282 = vld [vmem:[%s278] sm:$0xf]
        %v283 = vld [vmem:[%s278 + $0x4] sm:$0xf]
        %v284 = vld [vmem:[%s1] sm:$0xf]
        %v285 = vld [vmem:[%s1 + $0x4] sm:$0xf]
        %v286 = vld [vmem:[%s1 + $0x8] sm:$0xf]
        %v287 = vld [vmem:[%s1 + $0xc] sm:$0xf]
        %v288 = vld [vmem:[%s1 + $0x10] sm:$0xf]
        %v289 = vld [vmem:[%s1 + $0x14] sm:$0xf]
        %v290 = vld [vmem:[%s2] sm:$0x1]
        %v292 = vperm.slane %v290, 0
        %v296 = vunpack.c.l.b16 %v282
        %v297 = vunpack.c.l.b16 %v283
        %v298 = vpack.c.b16 %v297, %v296
        %v305 = vunpack.c.l.b16 %v284
        %v306 = vunpack.c.l.b16 %v285
        %v307 = vunpack.c.l.b16 %v286
        %v308 = vunpack.c.l.b16 %v287
        %v309 = vunpack.c.l.b16 %v288
        %v310 = vunpack.c.l.b16 %v289
        %v311 = vpack.c.b16 %v306, %v305
        %v312 = vpack.c.b16 %v308, %v307
        %v313 = vpack.c.b16 %v310, %v309
        %vm317 = vcmask 392192
        %v319 = vsel %vm317, %v298, 0
        %321 = vmatpush.bf16.msra.mxu0 0
        %322 = vmatpush.bf16.msra.mxu0 0
        %323 = vmatpush.bf16.msra.mxu0 0
        %324 = vmatpush.bf16.msra.mxu0 0
        %325 = vmatpush.bf16.msra.mxu0 0
        %326 = vmatpush.bf16.msra.mxu0 %v313
        %327 = vmatpush.bf16.msra.mxu0 %v312
        %328 = vmatpush.bf16.msra.mxu0 %v311
        %329 = vmatmul.bf16.gmra.mxu0 %v319
        %v330 = vpop.f32.mrf.mxu0
        %v331 = vadd.f32 %v292, %v330
        %v332 = vpop.f32.mrf.mxu0
        %v333 = vadd.f32 %v292, %v332
        %334 = vdwg.mxu0
        %vm335 = vcmask 261120
        %v336 = vsel %vm335, %v331, 0.0
        %337 = vadd.xlane.f32.xlu0 %v336
        %v338 = vpop.xlane.xlu0 %337
        %v339 = vsel %vm335, %v333, 0.0
        %340 = vadd.xlane.f32.xlu0 %v339
        %v341 = vpop.xlane.xlu0 %340
        %v342 = vrcp.pop 32.0
        %v343 = vmul.f32 32.0, %v342
        %v344 = vsub.f32 1.0, %v343
        %v345 = vmul.f32 %v342, %v344
        %v346 = vadd.f32 %v342, %v345
        %vm347 = vweird.f32 %v342
        %v348 = vsel %vm347, %v342, %v346
        %v349 = vmul.f32 %v338, %v348
        %v350 = vmul.f32 %v341, %v348
        %v351 = vsub.f32 %v331, %v349
        %v352 = vsub.f32 %v333, %v350
        %v353 = vmul.f32 %v351, %v351
        %v354 = vmul.f32 %v352, %v352
        %v355 = vsel %vm335, %v353, 0.0
        %356 = vadd.xlane.f32.xlu0 %v355
        %v357 = vpop.xlane.xlu0 %356
        %v358 = vsel %vm335, %v354, 0.0
        %359 = vadd.xlane.f32.xlu0 %v358
        %v360 = vpop.xlane.xlu0 %359
        %v361 = vmul.f32 %v357, %v348
        %v362 = vmul.f32 %v360, %v348
        %v363 = vadd.f32 %v361, 1e-05
        %v364 = vadd.f32 %v362, 1e-05
        %v365 = vrsqrt.pop %v363
        %v366 = vmul.f32 %v365, %v363
        %v367 = vmul.f32 %v366, %v365
        %v368 = vmul.f32 0.5, %v367
        %v369 = vsub.f32 1.5, %v368
        %v370 = vmul.f32 %v365, %v369
        %vm371 = vweird.f32 %v363
        %vm372 = vweird.f32 %v365
        %vm373 = vmor %vm371, %vm372
        %v374 = vsel %vm373, %v365, %v370
        %v375 = vrsqrt.pop %v364
        %v376 = vmul.f32 %v375, %v364
        %v377 = vmul.f32 %v376, %v375
        %v378 = vmul.f32 0.5, %v377
        %v379 = vsub.f32 1.5, %v378
        %v380 = vmul.f32 %v375, %v379
        %vm381 = vweird.f32 %v364
        %vm382 = vweird.f32 %v375
        %vm383 = vmor %vm381, %vm382
        %v384 = vsel %vm383, %v375, %v380
        %v385 = vmul.f32 %v351, %v374
        %v386 = vmul.f32 %v352, %v384
        %v387 = vld [vmem:[%s3] sm:$0x1]
        %v389 = vperm.slane %v387, 0
        %v391 = vmul.f32 %v385, %v389
        %v392 = vmul.f32 %v386, %v389
        %v393 = vld [vmem:[%s4] sm:$0x1]
        %v395 = vperm.slane %v393, 0
        %v397 = vadd.f32 %v391, %v395
        %v398 = vadd.f32 %v392, %v395
        %v399 = vld [vmem:[%s5] sm:$0xff]
        %v400 = vld [vmem:[%s5 + $0x8] sm:$0xff]
        %v401 = vadd.f32 %v397, %v399
        %v402 = vadd.f32 %v398, %v400
        %403 = vst.msk [vmem:[%s269] sm:$0xff] %vm335, %v401
        %404 = vst.msk [vmem:[%s269 + $0x8] sm:$0xff] %vm335, %v402
        %s405 = sand.u32 %s175, 1
        %s406 = scalar_lea.sflag [#allocation3], %s405
        %s407 = sand.u32 %s175, 1
        %s408 = smul.addr %s407, 16
        %s409 = scalar_lea.vmem [#allocation2], %s408
        // Predicated region
        $region45: #{image_embedder_forward.1} parent=43 // pred_check
          %p410 = pneg %p185
        $region46: #{image_embedder_forward.1} parent=43 // pred_check_branch
          %412 = sbr.rel (%p410) target = $region48
        $region47: #{image_embedder_forward.1} parent=43 // pred_region
          %s413 = smul.u32 2, %s25
          %415 = vsyncadd %s406, 0
          %s416 = smul.addr %s24, 2
          %s417 = sadd.s32 %s413, %s416
          %s418 = smul.addr %s417, 8
          %s419 = scalar_lea.hbm %s6, %s418
          %s420 = sshll.u32 %s409, 4
          %s421 = int_to_ptr.vmem [resolvable:$true] %s420
          %s422 = sshll.u32 %s419, 4
          %s423 = int_to_ptr.hbm [resolvable:$true] %s422
          %428 = dma.vmem_to_hbm [thread:$0]  %s421, 256, %s423, %s406, 128, 128, 8
        $region48: #{image_embedder_forward.1} parent=43 // pred_fallthru
          _
      $region44: #{image_embedder_forward.1} parent=5 // pred_fallthru
        _
      %p429 = scmp.le.s32.totalorder 2, %s15
      // Predicated region
      $region49: #{image_embedder_forward.1} parent=5 // pred_check
        %p430 = pneg %p429
      $region50: #{image_embedder_forward.1} parent=5 // pred_check_branch
        %432 = sbr.rel (%p430) target = $region52
      $region51: #{image_embedder_forward.1} parent=5 // pred_region
        %s433 = ssub.s32 %s15, 2
        // Predicated region
        $region53: #{image_embedder_forward.1} parent=51 // pred_check
          %p434 = pneg %p191
        $region54: #{image_embedder_forward.1} parent=51 // pred_check_branch
          %436 = sbr.rel (%p434) target = $region56
        $region55: #{image_embedder_forward.1} parent=51 // pred_region
          %s437 = sand.u32 %s176, 1
          %s438 = scalar_lea.sflag [#allocation3], %s437
          %s439 = sand.u32 %s176, 1
          %s440 = smul.addr %s439, 16
          %s441 = scalar_lea.vmem [#allocation2], %s440
          %443 = dma.done %s438, 256
        $region56: #{image_embedder_forward.1} parent=51 // pred_fallthru
          _
      $region52: #{image_embedder_forward.1} parent=5 // pred_fallthru
        _
    $region6: #{image_embedder_forward.1} parent=1 // loop_footer
      %s19 = sadd.s32 1, %s15
    $region7: #{image_embedder_forward.1} parent=1 // loop_footer_branch
      %14 = sbr.rel target = $region3
    $region8: #{image_embedder_forward.1} parent=1 // loop_exit
      _
    %444 = vsyncpa [#allocation3], 1
    %s445 = scalar_lea.sflag [#allocation3], 1
    %446 = vsyncpa %s445, 1

</llo_original>
